<compile_context>
chip_gen: v7x
topology: tpu7x:2x2x1
jax: 0.10.0
libtpu: 0.0.40
codegen_flags: <defaults>
</compile_context>

<pallas_src>
import jax
import jax.numpy as jnp
from jax.experimental import pallas as pl
from jax.experimental.pallas import tpu as pltpu


def _softplus(x):
    # Numerically stable softplus (matches torch.nn.Softplus with beta=1).
    return jnp.maximum(x, 0.0) + jnp.log1p(jnp.exp(-jnp.abs(x)))


def gcm_kernel(w_ref, o_ref):
    # w_ref: (C*C, 1) weights in VMEM (resident; constant block index)
    # o_ref: (C*C, hw_tile) lane-dense output tile for grid cell (b, t)
    sp = _softplus(w_ref[...].astype(jnp.float32))          # (C*C, 1): tiny
    o_ref[...] = jnp.broadcast_to(sp, o_ref.shape).astype(o_ref.dtype)


def _pick_hw_tile(hw, c):
    """Largest lane-dense spatial tile whose fp32 output block stays <= ~8 MiB."""
    budget_elems = (8 * 1024 * 1024) // (c * c * 4)
    if hw <= budget_elems:
        return hw                       # full extent (always legal block shape)
    t = (budget_elems // 128) * 128
    while t >= 128:
        if hw % t == 0:
            return t                    # multiple of 128 and divides H*W
        t -= 128
    return hw                           # fallback: single big block


def gcm_layers_forward(x, global_weights, input_height, input_width):
    """Pallas equivalent of gcm_layers.forward."""
    B = x.shape[0]
    C = global_weights.shape[0]
    H, W = input_height, input_width
    HW = H * W
    CC = C * C

    hw_tile = _pick_hw_tile(HW, C)
    n_hw_tiles = HW // hw_tile

    # Flatten the weight matrix so the kernel can lane-broadcast (C*C,1)->(C*C,hw).
    w_flat = global_weights.reshape(CC, 1)

    out_bytes = B * CC * HW * 4
    cost = pl.CostEstimate(
        flops=B * n_hw_tiles * CC * 2,                # the per-step softplus (tiny)
        transcendentals=B * n_hw_tiles * CC,
        bytes_accessed=out_bytes + B * n_hw_tiles * CC * 4,
    )

    y_flat = pl.pallas_call(
        gcm_kernel,
        out_shape=jax.ShapeDtypeStruct((B, CC, HW), jnp.float32),
        grid=(B, n_hw_tiles),
        in_specs=[pl.BlockSpec((CC, 1), lambda b, t: (0, 0))],
        out_specs=pl.BlockSpec((None, CC, hw_tile), lambda b, t: (b, 0, t)),
        compiler_params=pltpu.CompilerParams(
            dimension_semantics=("parallel", "parallel"),
            vmem_limit_bytes=32 * 1024 * 1024,
        ),
        cost_estimate=cost,
    )(w_flat)

    # Free, contiguous reshape back to the PyTorch output layout.
    return y_flat.reshape(B, C, C, H, W)


if __name__ == "__main__":
    key = jax.random.PRNGKey(0)
    B, C, H, W = 2, 4, 16, 16                       # class_no=4, 16x16 spatial

    # x is only used for its batch dimension in the reference module.
    x = jax.random.normal(key, (B, C, H, W), dtype=jnp.float32)

    # Deterministic parameter init, same as torch.nn.Parameter(torch.eye(class_no)).
    global_weights = jnp.eye(C, dtype=jnp.float32)

    y = gcm_layers_forward(x, global_weights, H, W)
    y = jax.block_until_ready(y)

    # Pure-JAX reference for verification.
    ref = jax.nn.softplus(
        jnp.broadcast_to(global_weights[None, :, :, None, None], (B, C, C, H, W))
    )

    assert y.shape == (B, C, C, H, W), y.shape
    assert y.dtype == jnp.float32
    assert jnp.allclose(y, ref, atol=1e-6, rtol=1e-6)

    print("KERNEL_OK")
</pallas_src>

<mosaic_0001>
module attributes {stable_mosaic.version = 11 : i64} {
  func.func @gcm_kernel(%arg0: i32, %arg1: i32, %arg2: memref<16x1xf32, #tpu.memory_space<vmem>>, %arg3: memref<1x16x256xf32, #tpu.memory_space<vmem>>) attributes {dimension_semantics = [#tpu.dimension_semantics<parallel>, #tpu.dimension_semantics<parallel>], iteration_bounds = array<i64: 2, 1>, scalar_prefetch = 0 : i64, scratch_operands = 0 : i64, tpu.core_type = #tpu.core_type<tc>, window_params = [{pipeline_mode = #tpu.pipeline_mode<synchronous>, transform_indices = @transform_0, window_bounds = array<i64: 16, 1>}, {transform_indices = @transform_1, window_bounds = array<i64: 1, 16, 256>}]} {
    %c0 = arith.constant 0 : index
    %c0_0 = arith.constant 0 : index
    %0 = vector.load %arg2[%c0, %c0_0] : memref<16x1xf32, #tpu.memory_space<vmem>>, vector<16x1xf32>
    %cst = arith.constant 0.000000e+00 : f32
    %1 = vector.broadcast %cst : f32 to vector<16x1xf32>
    %2 = arith.maximumf %0, %1 : vector<16x1xf32>
    %3 = math.absf %0 : vector<16x1xf32>
    %cst_1 = arith.constant 0.000000e+00 : f32
    %4 = vector.broadcast %cst_1 : f32 to vector<16x1xf32>
    %5 = arith.subf %4, %3 : vector<16x1xf32>
    %6 = math.exp %5 : vector<16x1xf32>
    %7 = math.log1p %6 : vector<16x1xf32>
    %8 = arith.addf %2, %7 : vector<16x1xf32>
    %9 = vector.shape_cast %8 : vector<16x1xf32> to vector<16x1xf32>
    %10 = vector.broadcast %9 : vector<16x1xf32> to vector<16x256xf32>
    %c0_2 = arith.constant 0 : index
    %c0_3 = arith.constant 0 : index
    %c0_4 = arith.constant 0 : index
    %11 = vector.load %arg3[%c0_2, %c0_3, %c0_4] : memref<1x16x256xf32, #tpu.memory_space<vmem>>, vector<1x16x256xf32>
    %12 = vector.shape_cast %11 : vector<1x16x256xf32> to vector<16x256xf32>
    %13 = vector.shape_cast %10 : vector<16x256xf32> to vector<1x16x256xf32>
    tpu.vector_store %arg3[%c0_2, %c0_3, %c0_4], %13 {strides = array<i32>} : memref<1x16x256xf32, #tpu.memory_space<vmem>>, vector<1x16x256xf32>,
    return
  }
  func.func @transform_0(%arg0: i32, %arg1: i32) -> (i32, i32) {
    %c0_i32 = arith.constant 0 : i32
    %c0_i32_0 = arith.constant 0 : i32
    %c0_i32_1 = arith.constant 0 : i32
    return %c0_i32, %c0_i32_0 : i32, i32
  }
  func.func @transform_1(%arg0: i32, %arg1: i32) -> (i32, i32, i32) {
    %c0_i32 = arith.constant 0 : i32
    %c0_i32_0 = arith.constant 0 : i32
    return %arg0, %c0_i32, %arg1 : i32, i32, i32
  }
}

</mosaic_0001>

<llo_original>
// kernel: tpu_custom_call.1
$region0: #{tpu_custom_call.1}
  #allocation0 [shape = 'u32[]', space=smem, size = 0x4, offset = 0x4, fixed_abs, tag = 'smem constant byte address 0x4 - core index']
  #allocation1 [shape = 'u32[144,128]{1,0:T(1,128)}', space=vmem, size = 0x12000, scoped, tag = 'internal scratch']
  %s0 = inlined_call_operand.vmem [shape: f32[16,1], index: 0, kind: input, shape index: {}]
  %s1 = inlined_call_operand.hbm [shape: f32[2,16,256], index: 1, kind: output, shape index: {}]
  %s2 = sld [smem:[#allocation0]]
  $region37: #{tpu_custom_call.1} parent=0
    _
  %s4 = ssub.s32 1, %s2
  %s5 = scalar_select 0, %s4, %s2
  $region1: #{tpu_custom_call.1} parent=0
    #allocation2 [shape = 'u8[32768]{0}', space=vmem, size = 0x8000, scoped, tag = 'output window, operand 0']
    #allocation3 [shape = 's32[2]{0}', space=sflag, size = 0x8, scoped, tag = 'scoped memory for tpu_custom_call.1']
    %6 = vsyncpa [#allocation3], 0
    %s7 = scalar_lea.sflag [#allocation3], 1
    %8 = vsyncpa %s7, 0
    loop: start=0, step=1, limit=4
    $region2: #{tpu_custom_call.1} parent=1 // loop_pre_header
      _
    $region3: #{tpu_custom_call.1} parent=1 // loop_header
      %s10 = sphi 0, %s14
      %p11 = scmp.ge.s32.totalorder %s10, 4
      %s17 = sphi 0, %s29
      %s18 = sphi 0, %s25
      %s19 = sphi 0, %s17
      %s20 = sphi 0, %s18
      %s21 = sphi 0, %s19
      %s22 = sphi 0, %s20
      %s30 = sphi 0, %s30
      %s32 = sphi 0, %s30
      %s33 = sphi 0, %s32
      %s47 = sphi 0, %s33
      %s55 = sphi 0, %s57
      %s58 = sphi 0, %s55
      %s59 = sphi 0, %s58
      %s75 = sphi 0, %s59
    $region4: #{tpu_custom_call.1} parent=1 // loop_header_branch
      %13 = sbr.rel (%p11) target = $region8
    $region5: #{tpu_custom_call.1} parent=1 // loop_body
      %s15 = ssub.s32 %s10, 1
      %s16 = ssub.s32 %s10, 2
      %s23 = sadd.s32 1, %s18
      %p24 = scmp.ge.s32.totalorder %s23, 1
      %s25 = scalar_select %p24, 0, %s23
      %s26 = sadd.s32 1, %s17
      %s27 = scalar_select %p24, %s26, %s17
      %p28 = scmp.ge.s32.totalorder %s27, 2
      %s29 = scalar_select %p28, 0, %s27
      %s31 = sadd.s32 %s30, 1
      %p34 = scmp.eq.s32.totalorder %s10, 1
      %p35 = scmp.ne.s32.totalorder %s30, %s32
      %p36 = scmp.eq.s32.totalorder %s10, 0
      %p37 = por %p35, %p36
      %p38 = scmp.ne.s32.totalorder %s30, %s32
      %p39 = scmp.eq.s32.totalorder %s15, 1
      %p40 = por %p38, %p39
      %p41 = scmp.ne.s32.totalorder %s32, %s33
      %p42 = scmp.eq.s32.totalorder %s15, 0
      %p43 = por %p41, %p42
      %p44 = scmp.ne.s32.totalorder %s32, %s33
      %p45 = scmp.eq.s32.totalorder %s16, 1
      %p46 = por %p44, %p45
      %p48 = scmp.ne.s32.totalorder %s33, %s47
      %p49 = scmp.eq.s32.totalorder %s16, 0
      %p50 = por %p48, %p49
      %s51 = ssub.s32 %s17, %s29
      %s52 = ssub.s32 %s18, %s25
      %s53 = sor.u32 %s51, %s52
      %p54 = scmp.eq.s32.totalorder %s53, 0
      %s56 = sadd.s32 %s55, 1
      %s57 = scalar_select %p54, %s55, %s56
      %p60 = pneg %p54
      %p61 = scmp.eq.s32.totalorder %s10, 1
      %p62 = por %p60, %p61
      %p63 = scmp.ne.s32.totalorder %s55, %s58
      %p64 = scmp.eq.s32.totalorder %s10, 0
      %p65 = por %p63, %p64
      %p66 = scmp.ne.s32.totalorder %s55, %s58
      %p67 = scmp.eq.s32.totalorder %s15, 1
      %p68 = por %p66, %p67
      %p69 = scmp.ne.s32.totalorder %s58, %s59
      %p70 = scmp.eq.s32.totalorder %s15, 0
      %p71 = por %p69, %p70
      %p72 = scmp.ne.s32.totalorder %s58, %s59
      %p73 = scmp.eq.s32.totalorder %s16, 1
      %p74 = por %p72, %p73
      %p76 = scmp.ne.s32.totalorder %s59, %s75
      %p77 = scmp.eq.s32.totalorder %s16, 0
      %p78 = por %p76, %p77
      %p79 = scmp.le.s32.totalorder 1, %s10
      %p80 = scmp.lt.s32.totalorder %s10, 3
      %p81 = pnand %p79, %p80
      %p82 = pneg %p81
      // Predicated region
      $region9: #{tpu_custom_call.1} parent=5 // pred_check
        _
      $region10: #{tpu_custom_call.1} parent=5 // pred_check_branch
        %84 = sbr.rel (%p81) target = $region12
      $region11: #{tpu_custom_call.1} parent=5 // pred_region
        %s85 = ssub.s32 %s10, 1
        // Predicated region
        $region13: #{tpu_custom_call.1} parent=11 // pred_check
          %p86 = pneg %p43
        $region14: #{tpu_custom_call.1} parent=11 // pred_check_branch
          %88 = sbr.rel (%p86) target = $region16
        $region15: #{tpu_custom_call.1} parent=11 // pred_region
          _
        $region16: #{tpu_custom_call.1} parent=11 // pred_fallthru
          _
      $region12: #{tpu_custom_call.1} parent=5 // pred_fallthru
        _
      %p89 = scmp.lt.s32.totalorder %s10, 2
      // Predicated region
      $region17: #{tpu_custom_call.1} parent=5 // pred_check
        %p90 = pneg %p89
      $region18: #{tpu_custom_call.1} parent=5 // pred_check_branch
        %92 = sbr.rel (%p90) target = $region20
      $region19: #{tpu_custom_call.1} parent=5 // pred_region
        _
      $region20: #{tpu_custom_call.1} parent=5 // pred_fallthru
        _
      %p93 = scmp.le.s32.totalorder 1, %s10
      %p94 = scmp.lt.s32.totalorder %s10, 3
      %p95 = pnand %p93, %p94
      %p96 = pneg %p95
      // Predicated region
      $region21: #{tpu_custom_call.1} parent=5 // pred_check
        _
      $region22: #{tpu_custom_call.1} parent=5 // pred_check_branch
        %98 = sbr.rel (%p95) target = $region24
      $region23: #{tpu_custom_call.1} parent=5 // pred_region
        %s99 = ssub.s32 %s10, 1
        %p100 = pneg %p43
        %p101 = pneg %p40
        %p102 = pneg %p71
        %p103 = pneg %p68
        %s104 = sand.u32 %s58, 1
        %s105 = scalar_lea.sflag [#allocation3], %s104
        %s106 = sand.u32 %s58, 1
        %s107 = smul.addr %s106, 32
        %s108 = scalar_lea.vmem [#allocation2], %s107
        %s109 = smul.u32 2, %s20
        %v110 = vld [vmem:[%s0] sm:$0xff]
        %v111 = vld [vmem:[%s0 + $0x8] sm:$0xff]
        %v112 = vmax.f32 %v110, 0.0
        %v113 = vmax.f32 %v111, 0.0
        %v114 = vand.u32 2147483647, %v110
        %v115 = vand.u32 2147483647, %v111
        %v116 = vsub.f32 0.0, %v114
        %v117 = vsub.f32 0.0, %v115
        %v118 = vmul.f32 %v116, 1.442695
        %v119 = vpow.pop %v118
        %v120 = vmul.f32 %v117, 1.442695
        %v121 = vpow.pop %v120
        %v122 = vadd.f32 %v119, 1.0
        %v123 = vlog2.pop %v122
        %v124 = vmul.f32 %v123, 0.6931472
        %v125 = vmul.f32 -0.5, %v119
        %v126 = vadd.f32 %v125, 1.0
        %v127 = vmul.f32 %v126, %v119
        %v128 = vand.u32 2147483647, %v119
        %vm129 = vcmp.lt.f32.partialorder %v128, 0.0004427343
        %v130 = vsel %vm129, %v127, %v124
        %v131 = vadd.f32 %v121, 1.0
        %v132 = vlog2.pop %v131
        %v133 = vmul.f32 %v132, 0.6931472
        %v134 = vmul.f32 -0.5, %v121
        %v135 = vadd.f32 %v134, 1.0
        %v136 = vmul.f32 %v135, %v121
        %v137 = vand.u32 2147483647, %v121
        %vm138 = vcmp.lt.f32.partialorder %v137, 0.0004427343
        %v139 = vsel %vm138, %v136, %v133
        %v140 = vadd.f32 %v112, %v130
        %v141 = vadd.f32 %v113, %v139
        %143 = vset.pattern.permute.xlu0 0
        %144 = vperm.xlu0 %143, %v140
        %v145 = vpop.permute.xlu0 %144
        %148 = vset.pattern.permute.xlu0 0
        %149 = vperm.xlu0 %148, %v141
        %v150 = vpop.permute.xlu0 %149
        %152 = vst [vmem:[%s108] sm:$0xff] %v145
        %153 = vst [vmem:[%s108 + $0x8] sm:$0xff] %v145
        %154 = vst [vmem:[%s108 + $0x10] sm:$0xff] %v150
        %155 = vst [vmem:[%s108 + $0x18] sm:$0xff] %v150
        %s156 = sand.u32 %s58, 1
        %s157 = scalar_lea.sflag [#allocation3], %s156
        %s158 = sand.u32 %s58, 1
        %s159 = smul.addr %s158, 32
        %s160 = scalar_lea.vmem [#allocation2], %s159
        // Predicated region
        $region25: #{tpu_custom_call.1} parent=23 // pred_check
          %p161 = pneg %p68
        $region26: #{tpu_custom_call.1} parent=23 // pred_check_branch
          %163 = sbr.rel (%p161) target = $region28
        $region27: #{tpu_custom_call.1} parent=23 // pred_region
          %s164 = smul.u32 2, %s20
          %s166 = ssub.s32 512, 512
          %167 = vsyncadd %s157, %s166
          %s168 = smul.addr %s19, 4
          %s169 = sadd.s32 %s164, %s168
          %s170 = smul.addr %s169, 128
          %s171 = scalar_lea.hbm %s1, %s170
          %s172 = sshll.u32 %s160, 4
          %s173 = int_to_ptr.vmem [resolvable:$true] %s172
          %178 = dma.vmem_to_hbm [thread:$0]  %s173, 512, %s171, %s157, 256, 256, 16
        $region28: #{tpu_custom_call.1} parent=23 // pred_fallthru
          _
      $region24: #{tpu_custom_call.1} parent=5 // pred_fallthru
        _
      %p179 = scmp.le.s32.totalorder 2, %s10
      // Predicated region
      $region29: #{tpu_custom_call.1} parent=5 // pred_check
        %p180 = pneg %p179
      $region30: #{tpu_custom_call.1} parent=5 // pred_check_branch
        %182 = sbr.rel (%p180) target = $region32
      $region31: #{tpu_custom_call.1} parent=5 // pred_region
        %s183 = ssub.s32 %s10, 2
        // Predicated region
        $region33: #{tpu_custom_call.1} parent=31 // pred_check
          %p184 = pneg %p74
        $region34: #{tpu_custom_call.1} parent=31 // pred_check_branch
          %186 = sbr.rel (%p184) target = $region36
        $region35: #{tpu_custom_call.1} parent=31 // pred_region
          %s187 = sand.u32 %s59, 1
          %s188 = scalar_lea.sflag [#allocation3], %s187
          %s189 = sand.u32 %s59, 1
          %s190 = smul.addr %s189, 32
          %s191 = scalar_lea.vmem [#allocation2], %s190
          %192 = dma.done %s188, 512
        $region36: #{tpu_custom_call.1} parent=31 // pred_fallthru
          _
      $region32: #{tpu_custom_call.1} parent=5 // pred_fallthru
        _
    $region6: #{tpu_custom_call.1} parent=1 // loop_footer
      %s14 = sadd.s32 1, %s10
    $region7: #{tpu_custom_call.1} parent=1 // loop_footer_branch
      %9 = sbr.rel target = $region3
    $region8: #{tpu_custom_call.1} parent=1 // loop_exit
      _
    %193 = vsyncpa [#allocation3], 1
    %s194 = scalar_lea.sflag [#allocation3], 1
    %195 = vsyncpa %s194, 1

</llo_original>
